<compile_context>
chip_gen: v7x
topology: tpu7x:2x2x1
jax: 0.10.0
libtpu: 0.0.40
codegen_flags: <defaults>
</compile_context>

<pallas_src>
import jax
import jax.numpy as jnp
from jax.experimental import pallas as pl
from jax.experimental.pallas import tpu as pltpu


def rnn_last_fc_kernel(x_ref, whh_t_ref, slab_ref, bfc_ref, out_ref):
    """x_ref: (B, T) when I==1 else (B, T, I); whh_t_ref: (H, H) = Whh^T;
    slab_ref: (I+2, H) = [Wih^T rows..., fused bias, W_fc]; bfc_ref: (1,) SMEM."""
    if x_ref.ndim == 2:                       # I == 1 fast path
        B, T = x_ref.shape
        I = 1
    else:                                     # general-I fallback
        B, T, I = x_ref.shape
    H = whh_t_ref.shape[0]

    whh_t = whh_t_ref[...]                    # (H, H), loaded once, already transposed
    slab = slab_ref[...]                      # (I+2, H), loaded once
    wih_t = slab[:I, :]                       # (I, H)  == Wih^T
    bias = jnp.broadcast_to(slab[I:I + 1, :], (B, H))   # fused b_ih+b_hh, hoisted
    wfc = slab[I + 1:I + 2, :]                # (1, H)

    h = jnp.zeros((B, H), jnp.float32)
    # T is static -> full unroll; all indices static, single basic block.
    for t in range(T):
        if I == 1:
            # (B,1) lane slice * (1,H) row + bias: pure VPU, independent of h.
            pre = x_ref[:, t:t + 1] * wih_t + bias
        else:
            pre = jax.lax.dot_general(
                x_ref[:, t, :], wih_t,
                (((1,), (0,)), ((), ())),
                preferred_element_type=jnp.float32) + bias     # x_t @ Wih^T + bias
        hw = jax.lax.dot_general(
            h, whh_t, (((1,), (0,)), ((), ())),
            preferred_element_type=jnp.float32)                # h @ Whh^T (MXU)
        h = jnp.tanh(hw + pre)                # MXU pop -> one add -> tanh

    # fc head once, on the last hidden state: (B,H)*(1,H) -> lane reduce -> (B,1).
    out_ref[...] = (jnp.sum(h * wfc, axis=-1, keepdims=True) + bfc_ref[0])


@jax.jit
def rnn_model_forward(x, w_ih, w_hh, b_ih, b_hh, w_fc, b_fc):
    """x: (B, T, I) float32 -> (B,) float32; matches RNNModel.forward."""
    B, T, I = x.shape
    H = w_hh.shape[0]

    # One-time wrapper-side prep (outside the kernel, negligible cost):
    #   * transpose Whh so the in-kernel contraction needs no per-step vxpose,
    #   * fold the two RNN biases,
    #   * pack all (*, H) small operands into one slab -> fewer input DMAs.
    whh_t = w_hh.T                                              # (H, H)
    bias = (b_ih + b_hh).reshape(1, H)                          # fused bias
    wih_t = w_ih.reshape(1, H) if I == 1 else w_ih.T            # (I, H)
    slab = jnp.concatenate([wih_t, bias, w_fc.reshape(1, H)], axis=0)  # (I+2, H)
    x_arg = x.reshape(B, T) if I == 1 else x                    # metadata-only reshape

    out = pl.pallas_call(
        rnn_last_fc_kernel,
        out_shape=jax.ShapeDtypeStruct((B, 1), jnp.float32),
        in_specs=[
            pl.BlockSpec(memory_space=pltpu.MemorySpace.VMEM),   # x (B,T) / (B,T,I)
            pl.BlockSpec(memory_space=pltpu.MemorySpace.VMEM),   # Whh^T (H,H)
            pl.BlockSpec(memory_space=pltpu.MemorySpace.VMEM),   # packed slab (I+2,H)
            pl.BlockSpec(memory_space=pltpu.MemorySpace.SMEM),   # b_fc scalar
        ],
        out_specs=pl.BlockSpec(memory_space=pltpu.MemorySpace.VMEM),
    )(x_arg, whh_t, slab, b_fc)

    return out[:, 0]                                             # .squeeze() -> (B,)


def _reference_forward(x, w_ih, w_hh, b_ih, b_hh, w_fc, b_fc):
    """Pure-JAX reference identical to the PyTorch module semantics."""
    B, T, I = x.shape
    H = w_hh.shape[0]

    def step(h, x_t):
        h_new = jnp.tanh(x_t @ w_ih.T + b_ih + h @ w_hh.T + b_hh)
        return h_new, h_new

    h0 = jnp.zeros((B, H), jnp.float32)
    h_last, _ = jax.lax.scan(step, h0, jnp.transpose(x, (1, 0, 2)))
    return (h_last @ w_fc.T + b_fc)[:, 0]


if __name__ == "__main__":
    # RNNModel(input_size=1, hidden_size=64, num_layers=1)
    B, T, I, H = 8, 8, 1, 64

    key = jax.random.PRNGKey(0)
    keys = jax.random.split(key, 8)
    bound = 1.0 / jnp.sqrt(H)  # PyTorch default init range

    x = jax.random.normal(keys[0], (B, T, I), dtype=jnp.float32)
    w_ih = jax.random.uniform(keys[1], (H, I), jnp.float32, -bound, bound)
    w_hh = jax.random.uniform(keys[2], (H, H), jnp.float32, -bound, bound)
    b_ih = jax.random.uniform(keys[3], (H,), jnp.float32, -bound, bound)
    b_hh = jax.random.uniform(keys[4], (H,), jnp.float32, -bound, bound)
    w_fc = jax.random.uniform(keys[5], (1, H), jnp.float32, -bound, bound)
    b_fc = jax.random.uniform(keys[6], (1,), jnp.float32, -bound, bound)

    out = rnn_model_forward(x, w_ih, w_hh, b_ih, b_hh, w_fc, b_fc)
    out = jax.block_until_ready(out)

    ref = _reference_forward(x, w_ih, w_hh, b_ih, b_hh, w_fc, b_fc)
    assert out.shape == (B,)
    assert jnp.allclose(out, ref, atol=1e-5, rtol=1e-5)

    print("KERNEL_OK")
</pallas_src>

<mosaic_0001>
module attributes {stable_mosaic.version = 11 : i64} {
  func.func @rnn_last_fc_kernel(%arg0: memref<8x8xf32, #tpu.memory_space<vmem>>, %arg1: memref<64x64xf32, #tpu.memory_space<vmem>>, %arg2: memref<3x64xf32, #tpu.memory_space<vmem>>, %arg3: memref<1xf32, #tpu.memory_space<smem>>, %arg4: memref<8x1xf32, #tpu.memory_space<vmem>>) attributes {dimension_semantics = [], scalar_prefetch = 0 : i64, scratch_operands = 0 : i64, tpu.core_type = #tpu.core_type<tc>} {
    %c0 = arith.constant 0 : index
    %c0_0 = arith.constant 0 : index
    %0 = vector.load %arg1[%c0, %c0_0] : memref<64x64xf32, #tpu.memory_space<vmem>>, vector<64x64xf32>
    %c0_1 = arith.constant 0 : index
    %c0_2 = arith.constant 0 : index
    %1 = vector.load %arg2[%c0_1, %c0_2] : memref<3x64xf32, #tpu.memory_space<vmem>>, vector<3x64xf32>
    %2 = vector.extract_strided_slice %1 {offsets = [0, 0], sizes = [1, 64], strides = [1, 1]} : vector<3x64xf32> to vector<1x64xf32>
    %3 = vector.extract_strided_slice %1 {offsets = [1, 0], sizes = [1, 64], strides = [1, 1]} : vector<3x64xf32> to vector<1x64xf32>
    %4 = vector.shape_cast %3 : vector<1x64xf32> to vector<1x64xf32>
    %5 = vector.broadcast %4 : vector<1x64xf32> to vector<8x64xf32>
    %6 = vector.extract_strided_slice %1 {offsets = [2, 0], sizes = [1, 64], strides = [1, 1]} : vector<3x64xf32> to vector<1x64xf32>
    %cst = arith.constant 0.000000e+00 : f32
    %7 = vector.broadcast %cst : f32 to vector<8x64xf32>
    %c0_3 = arith.constant 0 : index
    %c0_4 = arith.constant 0 : index
    %8 = vector.load %arg0[%c0_3, %c0_4] : memref<8x8xf32, #tpu.memory_space<vmem>>, vector<8x1xf32>
    %9 = vector.broadcast %8 : vector<8x1xf32> to vector<8x64xf32>
    %10 = vector.broadcast %2 : vector<1x64xf32> to vector<8x64xf32>
    %11 = arith.mulf %9, %10 : vector<8x64xf32>
    %12 = arith.addf %11, %5 : vector<8x64xf32>
    %cst_5 = arith.constant dense<0.000000e+00> : vector<8x64xf32>
    %13 = tpu.matmul %7, %0, %cst_5 {dimension_numbers = #tpu.dot_dimension_numbers<[1], [0], [0], [1], [0, 0, 1, 1], [], []>} : vector<8x64xf32>, vector<64x64xf32>, vector<8x64xf32> -> vector<8x64xf32>
    %14 = arith.addf %13, %12 : vector<8x64xf32>
    %15 = math.tanh %14 : vector<8x64xf32>
    %c0_6 = arith.constant 0 : index
    %c1 = arith.constant 1 : index
    %16 = vector.load %arg0[%c0_6, %c1] : memref<8x8xf32, #tpu.memory_space<vmem>>, vector<8x1xf32>
    %17 = vector.broadcast %16 : vector<8x1xf32> to vector<8x64xf32>
    %18 = vector.broadcast %2 : vector<1x64xf32> to vector<8x64xf32>
    %19 = arith.mulf %17, %18 : vector<8x64xf32>
    %20 = arith.addf %19, %5 : vector<8x64xf32>
    %cst_7 = arith.constant dense<0.000000e+00> : vector<8x64xf32>
    %21 = tpu.matmul %15, %0, %cst_7 {dimension_numbers = #tpu.dot_dimension_numbers<[1], [0], [0], [1], [0, 0, 1, 1], [], []>} : vector<8x64xf32>, vector<64x64xf32>, vector<8x64xf32> -> vector<8x64xf32>
    %22 = arith.addf %21, %20 : vector<8x64xf32>
    %23 = math.tanh %22 : vector<8x64xf32>
    %c0_8 = arith.constant 0 : index
    %c2 = arith.constant 2 : index
    %24 = vector.load %arg0[%c0_8, %c2] : memref<8x8xf32, #tpu.memory_space<vmem>>, vector<8x1xf32>
    %25 = vector.broadcast %24 : vector<8x1xf32> to vector<8x64xf32>
    %26 = vector.broadcast %2 : vector<1x64xf32> to vector<8x64xf32>
    %27 = arith.mulf %25, %26 : vector<8x64xf32>
    %28 = arith.addf %27, %5 : vector<8x64xf32>
    %cst_9 = arith.constant dense<0.000000e+00> : vector<8x64xf32>
    %29 = tpu.matmul %23, %0, %cst_9 {dimension_numbers = #tpu.dot_dimension_numbers<[1], [0], [0], [1], [0, 0, 1, 1], [], []>} : vector<8x64xf32>, vector<64x64xf32>, vector<8x64xf32> -> vector<8x64xf32>
    %30 = arith.addf %29, %28 : vector<8x64xf32>
    %31 = math.tanh %30 : vector<8x64xf32>
    %c0_10 = arith.constant 0 : index
    %c3 = arith.constant 3 : index
    %32 = vector.load %arg0[%c0_10, %c3] : memref<8x8xf32, #tpu.memory_space<vmem>>, vector<8x1xf32>
    %33 = vector.broadcast %32 : vector<8x1xf32> to vector<8x64xf32>
    %34 = vector.broadcast %2 : vector<1x64xf32> to vector<8x64xf32>
    %35 = arith.mulf %33, %34 : vector<8x64xf32>
    %36 = arith.addf %35, %5 : vector<8x64xf32>
    %cst_11 = arith.constant dense<0.000000e+00> : vector<8x64xf32>
    %37 = tpu.matmul %31, %0, %cst_11 {dimension_numbers = #tpu.dot_dimension_numbers<[1], [0], [0], [1], [0, 0, 1, 1], [], []>} : vector<8x64xf32>, vector<64x64xf32>, vector<8x64xf32> -> vector<8x64xf32>
    %38 = arith.addf %37, %36 : vector<8x64xf32>
    %39 = math.tanh %38 : vector<8x64xf32>
    %c0_12 = arith.constant 0 : index
    %c4 = arith.constant 4 : index
    %40 = vector.load %arg0[%c0_12, %c4] : memref<8x8xf32, #tpu.memory_space<vmem>>, vector<8x1xf32>
    %41 = vector.broadcast %40 : vector<8x1xf32> to vector<8x64xf32>
    %42 = vector.broadcast %2 : vector<1x64xf32> to vector<8x64xf32>
    %43 = arith.mulf %41, %42 : vector<8x64xf32>
    %44 = arith.addf %43, %5 : vector<8x64xf32>
    %cst_13 = arith.constant dense<0.000000e+00> : vector<8x64xf32>
    %45 = tpu.matmul %39, %0, %cst_13 {dimension_numbers = #tpu.dot_dimension_numbers<[1], [0], [0], [1], [0, 0, 1, 1], [], []>} : vector<8x64xf32>, vector<64x64xf32>, vector<8x64xf32> -> vector<8x64xf32>
    %46 = arith.addf %45, %44 : vector<8x64xf32>
    %47 = math.tanh %46 : vector<8x64xf32>
    %c0_14 = arith.constant 0 : index
    %c5 = arith.constant 5 : index
    %48 = vector.load %arg0[%c0_14, %c5] : memref<8x8xf32, #tpu.memory_space<vmem>>, vector<8x1xf32>
    %49 = vector.broadcast %48 : vector<8x1xf32> to vector<8x64xf32>
    %50 = vector.broadcast %2 : vector<1x64xf32> to vector<8x64xf32>
    %51 = arith.mulf %49, %50 : vector<8x64xf32>
    %52 = arith.addf %51, %5 : vector<8x64xf32>
    %cst_15 = arith.constant dense<0.000000e+00> : vector<8x64xf32>
    %53 = tpu.matmul %47, %0, %cst_15 {dimension_numbers = #tpu.dot_dimension_numbers<[1], [0], [0], [1], [0, 0, 1, 1], [], []>} : vector<8x64xf32>, vector<64x64xf32>, vector<8x64xf32> -> vector<8x64xf32>
    %54 = arith.addf %53, %52 : vector<8x64xf32>
    %55 = math.tanh %54 : vector<8x64xf32>
    %c0_16 = arith.constant 0 : index
    %c6 = arith.constant 6 : index
    %56 = vector.load %arg0[%c0_16, %c6] : memref<8x8xf32, #tpu.memory_space<vmem>>, vector<8x1xf32>
    %57 = vector.broadcast %56 : vector<8x1xf32> to vector<8x64xf32>
    %58 = vector.broadcast %2 : vector<1x64xf32> to vector<8x64xf32>
    %59 = arith.mulf %57, %58 : vector<8x64xf32>
    %60 = arith.addf %59, %5 : vector<8x64xf32>
    %cst_17 = arith.constant dense<0.000000e+00> : vector<8x64xf32>
    %61 = tpu.matmul %55, %0, %cst_17 {dimension_numbers = #tpu.dot_dimension_numbers<[1], [0], [0], [1], [0, 0, 1, 1], [], []>} : vector<8x64xf32>, vector<64x64xf32>, vector<8x64xf32> -> vector<8x64xf32>
    %62 = arith.addf %61, %60 : vector<8x64xf32>
    %63 = math.tanh %62 : vector<8x64xf32>
    %c0_18 = arith.constant 0 : index
    %c7 = arith.constant 7 : index
    %64 = vector.load %arg0[%c0_18, %c7] : memref<8x8xf32, #tpu.memory_space<vmem>>, vector<8x1xf32>
    %65 = vector.broadcast %64 : vector<8x1xf32> to vector<8x64xf32>
    %66 = vector.broadcast %2 : vector<1x64xf32> to vector<8x64xf32>
    %67 = arith.mulf %65, %66 : vector<8x64xf32>
    %68 = arith.addf %67, %5 : vector<8x64xf32>
    %cst_19 = arith.constant dense<0.000000e+00> : vector<8x64xf32>
    %69 = tpu.matmul %63, %0, %cst_19 {dimension_numbers = #tpu.dot_dimension_numbers<[1], [0], [0], [1], [0, 0, 1, 1], [], []>} : vector<8x64xf32>, vector<64x64xf32>, vector<8x64xf32> -> vector<8x64xf32>
    %70 = arith.addf %69, %68 : vector<8x64xf32>
    %71 = math.tanh %70 : vector<8x64xf32>
    %72 = vector.broadcast %6 : vector<1x64xf32> to vector<8x64xf32>
    %73 = arith.mulf %71, %72 : vector<8x64xf32>
    %cst_20 = arith.constant dense<0.000000e+00> : vector<8xf32>
    %74 = vector.multi_reduction <add>, %73, %cst_20 [1] : vector<8x64xf32> to vector<8xf32>
    %75 = vector.shape_cast %74 : vector<8xf32> to vector<8x1xf32>
    %c0_21 = arith.constant 0 : index
    %76 = memref.load %arg3[%c0_21] : memref<1xf32, #tpu.memory_space<smem>>
    %77 = vector.broadcast %76 : f32 to vector<8x1xf32>
    %78 = arith.addf %75, %77 : vector<8x1xf32>
    %c0_22 = arith.constant 0 : index
    %c0_23 = arith.constant 0 : index
    %79 = vector.load %arg4[%c0_22, %c0_23] : memref<8x1xf32, #tpu.memory_space<vmem>>, vector<8x1xf32>
    tpu.vector_store %arg4[%c0_22, %c0_23], %78 {strides = array<i32>} : memref<8x1xf32, #tpu.memory_space<vmem>>, vector<8x1xf32>,
    return
  }
}

</mosaic_0001>

<llo_original>
// kernel: rnn_model_forward.1
$region0: #{rnn_model_forward.1}
  #allocation0 [shape = 'u32[]', space=smem, size = 0x4, offset = 0x4, fixed_abs, tag = 'smem constant byte address 0x4 - core index']
  #allocation1 [shape = 'u32[144,128]{1,0:T(1,128)}', space=vmem, size = 0x12000, scoped, tag = 'internal scratch']
  #allocation2 [shape = 'f32[1]{0:T(128)S(6)}', space=smem, size = 0x200, scoped, tag = 'scoped memory for rnn_model_forward.1']
  %s0 = inlined_call_operand.vmem [shape: f32[8,8], index: 0, kind: input, shape index: {}]
  %s1 = inlined_call_operand.vmem [shape: f32[64,64], index: 1, kind: input, shape index: {}]
  %s2 = inlined_call_operand.vmem [shape: f32[3,64], index: 2, kind: input, shape index: {}]
  %s3 = inlined_call_operand.<no memory space> [shape: f32[1], index: 3, kind: input, shape index: {}]
  %s4 = inlined_call_operand.vmem [shape: f32[8,1], index: 4, kind: output, shape index: {}]
  %s5 = sld [smem:[#allocation0]]
  $region26: #{rnn_model_forward.1} parent=0
    _
  %s7 = ssub.s32 1, %s5
  %s8 = scalar_select 0, %s7, %s5
  %9 = sst [smem:[#allocation2]] %s3
  // Predicated region
  $region2: #{rnn_model_forward.1} parent=0 // pred_check
    _
  $region3: #{rnn_model_forward.1} parent=0 // pred_check_branch
    %11 = sbr.rel (0) target = $region5
  $region4: #{rnn_model_forward.1} parent=0 // pred_region
    _
  $region5: #{rnn_model_forward.1} parent=0 // pred_fallthru
    _
  // Predicated region
  $region6: #{rnn_model_forward.1} parent=0 // pred_check
    _
  $region7: #{rnn_model_forward.1} parent=0 // pred_check_branch
    %13 = sbr.rel (0) target = $region9
  $region8: #{rnn_model_forward.1} parent=0 // pred_region
    _
  $region9: #{rnn_model_forward.1} parent=0 // pred_fallthru
    _
  // Predicated region
  $region10: #{rnn_model_forward.1} parent=0 // pred_check
    _
  $region11: #{rnn_model_forward.1} parent=0 // pred_check_branch
    %15 = sbr.rel (0) target = $region13
  $region12: #{rnn_model_forward.1} parent=0 // pred_region
    _
  $region13: #{rnn_model_forward.1} parent=0 // pred_fallthru
    _
  // Predicated region
  $region14: #{rnn_model_forward.1} parent=0 // pred_check
    _
  $region15: #{rnn_model_forward.1} parent=0 // pred_check_branch
    %17 = sbr.rel (0) target = $region17
  $region16: #{rnn_model_forward.1} parent=0 // pred_region
    _
  $region17: #{rnn_model_forward.1} parent=0 // pred_fallthru
    _
  %v18 = vld [vmem:[%s1] sm:$0xff]
  %v19 = vld [vmem:[%s1 + $0x8] sm:$0xff]
  %v20 = vld [vmem:[%s1 + $0x10] sm:$0xff]
  %v21 = vld [vmem:[%s1 + $0x18] sm:$0xff]
  %v22 = vld [vmem:[%s1 + $0x20] sm:$0xff]
  %v23 = vld [vmem:[%s1 + $0x28] sm:$0xff]
  %v24 = vld [vmem:[%s1 + $0x30] sm:$0xff]
  %v25 = vld [vmem:[%s1 + $0x38] sm:$0xff]
  %v26 = vld [vmem:[%s2] sm:$0x7]
  %v27 = vlaneseq
  %v28 = vshrl.u32 %v27, 7
  %v29 = vsub.s32 1, %v28
  %v30 = vrot.slane %v26, %v29
  %v31 = vld [vmem:[%s0] sm:$0xff]
  %33 = vset.pattern.permute.xlu0 0
  %34 = vperm.xlu0 %33, %v31
  %v35 = vpop.permute.xlu0 %34
  %v37 = vlaneseq
  %v38 = vshrl.u32 %v37, 7
  %v39 = vsub.s32 0, %v38
  %v40 = vrot.slane %v26, %v39
  %v41 = vmul.f32 %v35, %v40
  %v42 = vadd.f32 %v41, %v30
  %vm43 = vcmask 523264
  %v45 = vsel %vm43, 0.0, 0
  %47 = vmatprep.subr.mxu0 0.0
  %48 = vmatpush1.msra.mxu0 %v18
  %49 = vmatprep.subr.mxu0 0.0
  %50 = vmatpush1.msra.mxu0 %v19
  %51 = vmatprep.subr.mxu0 0.0
  %52 = vmatpush1.msra.mxu0 %v20
  %53 = vmatprep.subr.mxu0 0.0
  %54 = vmatpush1.msra.mxu0 %v21
  %55 = vmatprep.subr.mxu0 0.0
  %56 = vmatpush1.msra.mxu0 %v22
  %57 = vmatprep.subr.mxu0 0.0
  %58 = vmatpush1.msra.mxu0 %v23
  %59 = vmatprep.subr.mxu0 0.0
  %60 = vmatpush1.msra.mxu0 %v24
  %61 = vmatprep.subr.mxu0 0.0
  %62 = vmatpush1.msra.mxu0 %v25
  %63 = vmatprep.subr.mxu0 0.0
  %64 = vmatpush1.msra.mxu0 0.0
  %65 = vmatprep.subr.mxu0 0.0
  %66 = vmatpush1.msra.mxu0 0.0
  %67 = vmatprep.subr.mxu0 0.0
  %68 = vmatpush1.msra.mxu0 0.0
  %69 = vmatprep.subr.mxu0 0.0
  %70 = vmatpush1.msra.mxu0 0.0
  %71 = vmatprep.subr.mxu0 0.0
  %72 = vmatpush1.msra.mxu0 0.0
  %73 = vmatprep.subr.mxu0 0.0
  %74 = vmatpush1.msra.mxu0 0.0
  %75 = vmatprep.subr.mxu0 0.0
  %76 = vmatpush1.msra.mxu0 0.0
  %77 = vmatprep.subr.mxu0 0.0
  %78 = vmatpush1.msra.mxu0 0.0
  %79 = vmatprep.subr.mxu0 0.0
  %80 = vmatpush1.msra.mxu0 0.0
  %81 = vmatprep.subr.mxu0 0.0
  %82 = vmatpush1.msra.mxu0 0.0
  %83 = vmatprep.subr.mxu0 0.0
  %84 = vmatpush1.msra.mxu0 0.0
  %85 = vmatprep.subr.mxu0 0.0
  %86 = vmatpush1.msra.mxu0 0.0
  %87 = vmatprep.subr.mxu0 0.0
  %88 = vmatpush1.msra.mxu0 0.0
  %89 = vmatprep.subr.mxu0 0.0
  %90 = vmatpush1.msra.mxu0 0.0
  %91 = vmatprep.subr.mxu0 0.0
  %92 = vmatpush1.msra.mxu0 0.0
  %93 = vmatprep.subr.mxu0 0.0
  %94 = vmatpush1.msra.mxu0 0.0
  %95 = vmatprep.subr.mxu0 0.0
  %96 = vmatpush1.msra.mxu0 0.0
  %97 = vmatprep.subr.mxu0 0.0
  %98 = vmatpush1.msra.mxu0 0.0
  %99 = vmatprep.subr.mxu0 0.0
  %100 = vmatpush1.msra.mxu0 0.0
  %101 = vmatprep.subr.mxu0 0.0
  %102 = vmatpush1.msra.mxu0 0.0
  %103 = vmatprep.subr.mxu0 0.0
  %104 = vmatpush1.msra.mxu0 0.0
  %105 = vmatprep.subr.mxu0 0.0
  %106 = vmatpush1.msra.mxu0 0.0
  %107 = vmatprep.subr.mxu0 0.0
  %108 = vmatpush1.msra.mxu0 0.0
  %109 = vmatprep.subr.mxu0 0.0
  %110 = vmatpush1.msra.mxu0 0.0
  %111 = vmatprep.mubr.f32.mxu0 0.0
  %112 = vmatmul.mubr.f32.gmra.mrb[0].mxu0 %v45
  %v113 = vpop.f32.mrb[0].mxu0
  %v114 = vadd.f32 %v42, %v113
  %v115 = vpop.f32.mrb[0].mxu0
  %116 = vdwg.mxu0
  %v117 = vtanh.pop %v114
  %118 = vset.pattern.permute.xlu0 1
  %119 = vperm.xlu0 %118, %v31
  %v120 = vpop.permute.xlu0 %119
  %v122 = vmul.f32 %v120, %v40
  %v123 = vadd.f32 %v122, %v30
  %v125 = vsel %vm43, %v117, 0
  %127 = vmatprep.subr.mxu0 0.0
  %128 = vmatpush1.msra.mxu0 %v18
  %129 = vmatprep.subr.mxu0 0.0
  %130 = vmatpush1.msra.mxu0 %v19
  %131 = vmatprep.subr.mxu0 0.0
  %132 = vmatpush1.msra.mxu0 %v20
  %133 = vmatprep.subr.mxu0 0.0
  %134 = vmatpush1.msra.mxu0 %v21
  %135 = vmatprep.subr.mxu0 0.0
  %136 = vmatpush1.msra.mxu0 %v22
  %137 = vmatprep.subr.mxu0 0.0
  %138 = vmatpush1.msra.mxu0 %v23
  %139 = vmatprep.subr.mxu0 0.0
  %140 = vmatpush1.msra.mxu0 %v24
  %141 = vmatprep.subr.mxu0 0.0
  %142 = vmatpush1.msra.mxu0 %v25
  %143 = vmatprep.subr.mxu0 0.0
  %144 = vmatpush1.msra.mxu0 0.0
  %145 = vmatprep.subr.mxu0 0.0
  %146 = vmatpush1.msra.mxu0 0.0
  %147 = vmatprep.subr.mxu0 0.0
  %148 = vmatpush1.msra.mxu0 0.0
  %149 = vmatprep.subr.mxu0 0.0
  %150 = vmatpush1.msra.mxu0 0.0
  %151 = vmatprep.subr.mxu0 0.0
  %152 = vmatpush1.msra.mxu0 0.0
  %153 = vmatprep.subr.mxu0 0.0
  %154 = vmatpush1.msra.mxu0 0.0
  %155 = vmatprep.subr.mxu0 0.0
  %156 = vmatpush1.msra.mxu0 0.0
  %157 = vmatprep.subr.mxu0 0.0
  %158 = vmatpush1.msra.mxu0 0.0
  %159 = vmatprep.subr.mxu0 0.0
  %160 = vmatpush1.msra.mxu0 0.0
  %161 = vmatprep.subr.mxu0 0.0
  %162 = vmatpush1.msra.mxu0 0.0
  %163 = vmatprep.subr.mxu0 0.0
  %164 = vmatpush1.msra.mxu0 0.0
  %165 = vmatprep.subr.mxu0 0.0
  %166 = vmatpush1.msra.mxu0 0.0
  %167 = vmatprep.subr.mxu0 0.0
  %168 = vmatpush1.msra.mxu0 0.0
  %169 = vmatprep.subr.mxu0 0.0
  %170 = vmatpush1.msra.mxu0 0.0
  %171 = vmatprep.subr.mxu0 0.0
  %172 = vmatpush1.msra.mxu0 0.0
  %173 = vmatprep.subr.mxu0 0.0
  %174 = vmatpush1.msra.mxu0 0.0
  %175 = vmatprep.subr.mxu0 0.0
  %176 = vmatpush1.msra.mxu0 0.0
  %177 = vmatprep.subr.mxu0 0.0
  %178 = vmatpush1.msra.mxu0 0.0
  %179 = vmatprep.subr.mxu0 0.0
  %180 = vmatpush1.msra.mxu0 0.0
  %181 = vmatprep.subr.mxu0 0.0
  %182 = vmatpush1.msra.mxu0 0.0
  %183 = vmatprep.subr.mxu0 0.0
  %184 = vmatpush1.msra.mxu0 0.0
  %185 = vmatprep.subr.mxu0 0.0
  %186 = vmatpush1.msra.mxu0 0.0
  %187 = vmatprep.subr.mxu0 0.0
  %188 = vmatpush1.msra.mxu0 0.0
  %189 = vmatprep.subr.mxu0 0.0
  %190 = vmatpush1.msra.mxu0 0.0
  %191 = vmatprep.mubr.f32.mxu0 0.0
  %192 = vmatmul.mubr.f32.gmra.mrb[0].mxu0 %v125
  %v193 = vpop.f32.mrb[0].mxu0
  %v194 = vadd.f32 %v123, %v193
  %v195 = vpop.f32.mrb[0].mxu0
  %196 = vdwg.mxu0
  %v197 = vtanh.pop %v194
  %198 = vset.pattern.permute.xlu0 2
  %199 = vperm.xlu0 %198, %v31
  %v200 = vpop.permute.xlu0 %199
  %v202 = vmul.f32 %v200, %v40
  %v203 = vadd.f32 %v202, %v30
  %v205 = vsel %vm43, %v197, 0
  %207 = vmatprep.subr.mxu0 0.0
  %208 = vmatpush1.msra.mxu0 %v18
  %209 = vmatprep.subr.mxu0 0.0
  %210 = vmatpush1.msra.mxu0 %v19
  %211 = vmatprep.subr.mxu0 0.0
  %212 = vmatpush1.msra.mxu0 %v20
  %213 = vmatprep.subr.mxu0 0.0
  %214 = vmatpush1.msra.mxu0 %v21
  %215 = vmatprep.subr.mxu0 0.0
  %216 = vmatpush1.msra.mxu0 %v22
  %217 = vmatprep.subr.mxu0 0.0
  %218 = vmatpush1.msra.mxu0 %v23
  %219 = vmatprep.subr.mxu0 0.0
  %220 = vmatpush1.msra.mxu0 %v24
  %221 = vmatprep.subr.mxu0 0.0
  %222 = vmatpush1.msra.mxu0 %v25
  %223 = vmatprep.subr.mxu0 0.0
  %224 = vmatpush1.msra.mxu0 0.0
  %225 = vmatprep.subr.mxu0 0.0
  %226 = vmatpush1.msra.mxu0 0.0
  %227 = vmatprep.subr.mxu0 0.0
  %228 = vmatpush1.msra.mxu0 0.0
  %229 = vmatprep.subr.mxu0 0.0
  %230 = vmatpush1.msra.mxu0 0.0
  %231 = vmatprep.subr.mxu0 0.0
  %232 = vmatpush1.msra.mxu0 0.0
  %233 = vmatprep.subr.mxu0 0.0
  %234 = vmatpush1.msra.mxu0 0.0
  %235 = vmatprep.subr.mxu0 0.0
  %236 = vmatpush1.msra.mxu0 0.0
  %237 = vmatprep.subr.mxu0 0.0
  %238 = vmatpush1.msra.mxu0 0.0
  %239 = vmatprep.subr.mxu0 0.0
  %240 = vmatpush1.msra.mxu0 0.0
  %241 = vmatprep.subr.mxu0 0.0
  %242 = vmatpush1.msra.mxu0 0.0
  %243 = vmatprep.subr.mxu0 0.0
  %244 = vmatpush1.msra.mxu0 0.0
  %245 = vmatprep.subr.mxu0 0.0
  %246 = vmatpush1.msra.mxu0 0.0
  %247 = vmatprep.subr.mxu0 0.0
  %248 = vmatpush1.msra.mxu0 0.0
  %249 = vmatprep.subr.mxu0 0.0
  %250 = vmatpush1.msra.mxu0 0.0
  %251 = vmatprep.subr.mxu0 0.0
  %252 = vmatpush1.msra.mxu0 0.0
  %253 = vmatprep.subr.mxu0 0.0
  %254 = vmatpush1.msra.mxu0 0.0
  %255 = vmatprep.subr.mxu0 0.0
  %256 = vmatpush1.msra.mxu0 0.0
  %257 = vmatprep.subr.mxu0 0.0
  %258 = vmatpush1.msra.mxu0 0.0
  %259 = vmatprep.subr.mxu0 0.0
  %260 = vmatpush1.msra.mxu0 0.0
  %261 = vmatprep.subr.mxu0 0.0
  %262 = vmatpush1.msra.mxu0 0.0
  %263 = vmatprep.subr.mxu0 0.0
  %264 = vmatpush1.msra.mxu0 0.0
  %265 = vmatprep.subr.mxu0 0.0
  %266 = vmatpush1.msra.mxu0 0.0
  %267 = vmatprep.subr.mxu0 0.0
  %268 = vmatpush1.msra.mxu0 0.0
  %269 = vmatprep.subr.mxu0 0.0
  %270 = vmatpush1.msra.mxu0 0.0
  %271 = vmatprep.mubr.f32.mxu0 0.0
  %272 = vmatmul.mubr.f32.gmra.mrb[0].mxu0 %v205
  %v273 = vpop.f32.mrb[0].mxu0
  %v274 = vadd.f32 %v203, %v273
  %v275 = vpop.f32.mrb[0].mxu0
  %276 = vdwg.mxu0
  %v277 = vtanh.pop %v274
  %278 = vset.pattern.permute.xlu0 3
  %279 = vperm.xlu0 %278, %v31
  %v280 = vpop.permute.xlu0 %279
  %v282 = vmul.f32 %v280, %v40
  %v283 = vadd.f32 %v282, %v30
  %v285 = vsel %vm43, %v277, 0
  %287 = vmatprep.subr.mxu0 0.0
  %288 = vmatpush1.msra.mxu0 %v18
  %289 = vmatprep.subr.mxu0 0.0
  %290 = vmatpush1.msra.mxu0 %v19
  %291 = vmatprep.subr.mxu0 0.0
  %292 = vmatpush1.msra.mxu0 %v20
  %293 = vmatprep.subr.mxu0 0.0
  %294 = vmatpush1.msra.mxu0 %v21
  %295 = vmatprep.subr.mxu0 0.0
  %296 = vmatpush1.msra.mxu0 %v22
  %297 = vmatprep.subr.mxu0 0.0
  %298 = vmatpush1.msra.mxu0 %v23
  %299 = vmatprep.subr.mxu0 0.0
  %300 = vmatpush1.msra.mxu0 %v24
  %301 = vmatprep.subr.mxu0 0.0
  %302 = vmatpush1.msra.mxu0 %v25
  %303 = vmatprep.subr.mxu0 0.0
  %304 = vmatpush1.msra.mxu0 0.0
  %305 = vmatprep.subr.mxu0 0.0
  %306 = vmatpush1.msra.mxu0 0.0
  %307 = vmatprep.subr.mxu0 0.0
  %308 = vmatpush1.msra.mxu0 0.0
  %309 = vmatprep.subr.mxu0 0.0
  %310 = vmatpush1.msra.mxu0 0.0
  %311 = vmatprep.subr.mxu0 0.0
  %312 = vmatpush1.msra.mxu0 0.0
  %313 = vmatprep.subr.mxu0 0.0
  %314 = vmatpush1.msra.mxu0 0.0
  %315 = vmatprep.subr.mxu0 0.0
  %316 = vmatpush1.msra.mxu0 0.0
  %317 = vmatprep.subr.mxu0 0.0
  %318 = vmatpush1.msra.mxu0 0.0
  %319 = vmatprep.subr.mxu0 0.0
  %320 = vmatpush1.msra.mxu0 0.0
  %321 = vmatprep.subr.mxu0 0.0
  %322 = vmatpush1.msra.mxu0 0.0
  %323 = vmatprep.subr.mxu0 0.0
  %324 = vmatpush1.msra.mxu0 0.0
  %325 = vmatprep.subr.mxu0 0.0
  %326 = vmatpush1.msra.mxu0 0.0
  %327 = vmatprep.subr.mxu0 0.0
  %328 = vmatpush1.msra.mxu0 0.0
  %329 = vmatprep.subr.mxu0 0.0
  %330 = vmatpush1.msra.mxu0 0.0
  %331 = vmatprep.subr.mxu0 0.0
  %332 = vmatpush1.msra.mxu0 0.0
  %333 = vmatprep.subr.mxu0 0.0
  %334 = vmatpush1.msra.mxu0 0.0
  %335 = vmatprep.subr.mxu0 0.0
  %336 = vmatpush1.msra.mxu0 0.0
  %337 = vmatprep.subr.mxu0 0.0
  %338 = vmatpush1.msra.mxu0 0.0
  %339 = vmatprep.subr.mxu0 0.0
  %340 = vmatpush1.msra.mxu0 0.0
  %341 = vmatprep.subr.mxu0 0.0
  %342 = vmatpush1.msra.mxu0 0.0
  %343 = vmatprep.subr.mxu0 0.0
  %344 = vmatpush1.msra.mxu0 0.0
  %345 = vmatprep.subr.mxu0 0.0
  %346 = vmatpush1.msra.mxu0 0.0
  %347 = vmatprep.subr.mxu0 0.0
  %348 = vmatpush1.msra.mxu0 0.0
  %349 = vmatprep.subr.mxu0 0.0
  %350 = vmatpush1.msra.mxu0 0.0
  %351 = vmatprep.mubr.f32.mxu0 0.0
  %352 = vmatmul.mubr.f32.gmra.mrb[0].mxu0 %v285
  %v353 = vpop.f32.mrb[0].mxu0
  %v354 = vadd.f32 %v283, %v353
  %v355 = vpop.f32.mrb[0].mxu0
  %356 = vdwg.mxu0
  %v357 = vtanh.pop %v354
  %358 = vset.pattern.permute.xlu0 4
  %359 = vperm.xlu0 %358, %v31
  %v360 = vpop.permute.xlu0 %359
  %v362 = vmul.f32 %v360, %v40
  %v363 = vadd.f32 %v362, %v30
  %v365 = vsel %vm43, %v357, 0
  %367 = vmatprep.subr.mxu0 0.0
  %368 = vmatpush1.msra.mxu0 %v18
  %369 = vmatprep.subr.mxu0 0.0
  %370 = vmatpush1.msra.mxu0 %v19
  %371 = vmatprep.subr.mxu0 0.0
  %372 = vmatpush1.msra.mxu0 %v20
  %373 = vmatprep.subr.mxu0 0.0
  %374 = vmatpush1.msra.mxu0 %v21
  %375 = vmatprep.subr.mxu0 0.0
  %376 = vmatpush1.msra.mxu0 %v22
  %377 = vmatprep.subr.mxu0 0.0
  %378 = vmatpush1.msra.mxu0 %v23
  %379 = vmatprep.subr.mxu0 0.0
  %380 = vmatpush1.msra.mxu0 %v24
  %381 = vmatprep.subr.mxu0 0.0
  %382 = vmatpush1.msra.mxu0 %v25
  %383 = vmatprep.subr.mxu0 0.0
  %384 = vmatpush1.msra.mxu0 0.0
  %385 = vmatprep.subr.mxu0 0.0
  %386 = vmatpush1.msra.mxu0 0.0
  %387 = vmatprep.subr.mxu0 0.0
  %388 = vmatpush1.msra.mxu0 0.0
  %389 = vmatprep.subr.mxu0 0.0
  %390 = vmatpush1.msra.mxu0 0.0
  %391 = vmatprep.subr.mxu0 0.0
  %392 = vmatpush1.msra.mxu0 0.0
  %393 = vmatprep.subr.mxu0 0.0
  %394 = vmatpush1.msra.mxu0 0.0
  %395 = vmatprep.subr.mxu0 0.0
  %396 = vmatpush1.msra.mxu0 0.0
  %397 = vmatprep.subr.mxu0 0.0
  %398 = vmatpush1.msra.mxu0 0.0
  %399 = vmatprep.subr.mxu0 0.0
  %400 = vmatpush1.msra.mxu0 0.0
  %401 = vmatprep.subr.mxu0 0.0
  %402 = vmatpush1.msra.mxu0 0.0
  %403 = vmatprep.subr.mxu0 0.0
  %404 = vmatpush1.msra.mxu0 0.0
  %405 = vmatprep.subr.mxu0 0.0
  %406 = vmatpush1.msra.mxu0 0.0
  %407 = vmatprep.subr.mxu0 0.0
  %408 = vmatpush1.msra.mxu0 0.0
  %409 = vmatprep.subr.mxu0 0.0
  %410 = vmatpush1.msra.mxu0 0.0
  %411 = vmatprep.subr.mxu0 0.0
  %412 = vmatpush1.msra.mxu0 0.0
  %413 = vmatprep.subr.mxu0 0.0
  %414 = vmatpush1.msra.mxu0 0.0
  %415 = vmatprep.subr.mxu0 0.0
  %416 = vmatpush1.msra.mxu0 0.0
  %417 = vmatprep.subr.mxu0 0.0
  %418 = vmatpush1.msra.mxu0 0.0
  %419 = vmatprep.subr.mxu0 0.0
  %420 = vmatpush1.msra.mxu0 0.0
  %421 = vmatprep.subr.mxu0 0.0
  %422 = vmatpush1.msra.mxu0 0.0
  %423 = vmatprep.subr.mxu0 0.0
  %424 = vmatpush1.msra.mxu0 0.0
  %425 = vmatprep.subr.mxu0 0.0
  %426 = vmatpush1.msra.mxu0 0.0
  %427 = vmatprep.subr.mxu0 0.0
  %428 = vmatpush1.msra.mxu0 0.0
  %429 = vmatprep.subr.mxu0 0.0
  %430 = vmatpush1.msra.mxu0 0.0
  %431 = vmatprep.mubr.f32.mxu0 0.0
  %432 = vmatmul.mubr.f32.gmra.mrb[0].mxu0 %v365
  %v433 = vpop.f32.mrb[0].mxu0
  %v434 = vadd.f32 %v363, %v433
  %v435 = vpop.f32.mrb[0].mxu0
  %436 = vdwg.mxu0
  %v437 = vtanh.pop %v434
  %438 = vset.pattern.permute.xlu0 5
  %439 = vperm.xlu0 %438, %v31
  %v440 = vpop.permute.xlu0 %439
  %v442 = vmul.f32 %v440, %v40
  %v443 = vadd.f32 %v442, %v30
  %v445 = vsel %vm43, %v437, 0
  %447 = vmatprep.subr.mxu0 0.0
  %448 = vmatpush1.msra.mxu0 %v18
  %449 = vmatprep.subr.mxu0 0.0
  %450 = vmatpush1.msra.mxu0 %v19
  %451 = vmatprep.subr.mxu0 0.0
  %452 = vmatpush1.msra.mxu0 %v20
  %453 = vmatprep.subr.mxu0 0.0
  %454 = vmatpush1.msra.mxu0 %v21
  %455 = vmatprep.subr.mxu0 0.0
  %456 = vmatpush1.msra.mxu0 %v22
  %457 = vmatprep.subr.mxu0 0.0
  %458 = vmatpush1.msra.mxu0 %v23
  %459 = vmatprep.subr.mxu0 0.0
  %460 = vmatpush1.msra.mxu0 %v24
  %461 = vmatprep.subr.mxu0 0.0
  %462 = vmatpush1.msra.mxu0 %v25
  %463 = vmatprep.subr.mxu0 0.0
  %464 = vmatpush1.msra.mxu0 0.0
  %465 = vmatprep.subr.mxu0 0.0
  %466 = vmatpush1.msra.mxu0 0.0
  %467 = vmatprep.subr.mxu0 0.0
  %468 = vmatpush1.msra.mxu0 0.0
  %469 = vmatprep.subr.mxu0 0.0
  %470 = vmatpush1.msra.mxu0 0.0
  %471 = vmatprep.subr.mxu0 0.0
  %472 = vmatpush1.msra.mxu0 0.0
  %473 = vmatprep.subr.mxu0 0.0
  %474 = vmatpush1.msra.mxu0 0.0
  %475 = vmatprep.subr.mxu0 0.0
  %476 = vmatpush1.msra.mxu0 0.0
  %477 = vmatprep.subr.mxu0 0.0
  %478 = vmatpush1.msra.mxu0 0.0
  %479 = vmatprep.subr.mxu0 0.0
  %480 = vmatpush1.msra.mxu0 0.0
  %481 = vmatprep.subr.mxu0 0.0
  %482 = vmatpush1.msra.mxu0 0.0
  %483 = vmatprep.subr.mxu0 0.0
  %484 = vmatpush1.msra.mxu0 0.0
  %485 = vmatprep.subr.mxu0 0.0
  %486 = vmatpush1.msra.mxu0 0.0
  %487 = vmatprep.subr.mxu0 0.0
  %488 = vmatpush1.msra.mxu0 0.0
  %489 = vmatprep.subr.mxu0 0.0
  %490 = vmatpush1.msra.mxu0 0.0
  %491 = vmatprep.subr.mxu0 0.0
  %492 = vmatpush1.msra.mxu0 0.0
  %493 = vmatprep.subr.mxu0 0.0
  %494 = vmatpush1.msra.mxu0 0.0
  %495 = vmatprep.subr.mxu0 0.0
  %496 = vmatpush1.msra.mxu0 0.0
  %497 = vmatprep.subr.mxu0 0.0
  %498 = vmatpush1.msra.mxu0 0.0
  %499 = vmatprep.subr.mxu0 0.0
  %500 = vmatpush1.msra.mxu0 0.0
  %501 = vmatprep.subr.mxu0 0.0
  %502 = vmatpush1.msra.mxu0 0.0
  %503 = vmatprep.subr.mxu0 0.0
  %504 = vmatpush1.msra.mxu0 0.0
  %505 = vmatprep.subr.mxu0 0.0
  %506 = vmatpush1.msra.mxu0 0.0
  %507 = vmatprep.subr.mxu0 0.0
  %508 = vmatpush1.msra.mxu0 0.0
  %509 = vmatprep.subr.mxu0 0.0
  %510 = vmatpush1.msra.mxu0 0.0
  %511 = vmatprep.mubr.f32.mxu0 0.0
  %512 = vmatmul.mubr.f32.gmra.mrb[0].mxu0 %v445
  %v513 = vpop.f32.mrb[0].mxu0
  %v514 = vadd.f32 %v443, %v513
  %v515 = vpop.f32.mrb[0].mxu0
  %516 = vdwg.mxu0
  %v517 = vtanh.pop %v514
  %518 = vset.pattern.permute.xlu0 6
  %519 = vperm.xlu0 %518, %v31
  %v520 = vpop.permute.xlu0 %519
  %v522 = vmul.f32 %v520, %v40
  %v523 = vadd.f32 %v522, %v30
  %v525 = vsel %vm43, %v517, 0
  %527 = vmatprep.subr.mxu0 0.0
  %528 = vmatpush1.msra.mxu0 %v18
  %529 = vmatprep.subr.mxu0 0.0
  %530 = vmatpush1.msra.mxu0 %v19
  %531 = vmatprep.subr.mxu0 0.0
  %532 = vmatpush1.msra.mxu0 %v20
  %533 = vmatprep.subr.mxu0 0.0
  %534 = vmatpush1.msra.mxu0 %v21
  %535 = vmatprep.subr.mxu0 0.0
  %536 = vmatpush1.msra.mxu0 %v22
  %537 = vmatprep.subr.mxu0 0.0
  %538 = vmatpush1.msra.mxu0 %v23
  %539 = vmatprep.subr.mxu0 0.0
  %540 = vmatpush1.msra.mxu0 %v24
  %541 = vmatprep.subr.mxu0 0.0
  %542 = vmatpush1.msra.mxu0 %v25
  %543 = vmatprep.subr.mxu0 0.0
  %544 = vmatpush1.msra.mxu0 0.0
  %545 = vmatprep.subr.mxu0 0.0
  %546 = vmatpush1.msra.mxu0 0.0
  %547 = vmatprep.subr.mxu0 0.0
  %548 = vmatpush1.msra.mxu0 0.0
  %549 = vmatprep.subr.mxu0 0.0
  %550 = vmatpush1.msra.mxu0 0.0
  %551 = vmatprep.subr.mxu0 0.0
  %552 = vmatpush1.msra.mxu0 0.0
  %553 = vmatprep.subr.mxu0 0.0
  %554 = vmatpush1.msra.mxu0 0.0
  %555 = vmatprep.subr.mxu0 0.0
  %556 = vmatpush1.msra.mxu0 0.0
  %557 = vmatprep.subr.mxu0 0.0
  %558 = vmatpush1.msra.mxu0 0.0
  %559 = vmatprep.subr.mxu0 0.0
  %560 = vmatpush1.msra.mxu0 0.0
  %561 = vmatprep.subr.mxu0 0.0
  %562 = vmatpush1.msra.mxu0 0.0
  %563 = vmatprep.subr.mxu0 0.0
  %564 = vmatpush1.msra.mxu0 0.0
  %565 = vmatprep.subr.mxu0 0.0
  %566 = vmatpush1.msra.mxu0 0.0
  %567 = vmatprep.subr.mxu0 0.0
  %568 = vmatpush1.msra.mxu0 0.0
  %569 = vmatprep.subr.mxu0 0.0
  %570 = vmatpush1.msra.mxu0 0.0
  %571 = vmatprep.subr.mxu0 0.0
  %572 = vmatpush1.msra.mxu0 0.0
  %573 = vmatprep.subr.mxu0 0.0
  %574 = vmatpush1.msra.mxu0 0.0
  %575 = vmatprep.subr.mxu0 0.0
  %576 = vmatpush1.msra.mxu0 0.0
  %577 = vmatprep.subr.mxu0 0.0
  %578 = vmatpush1.msra.mxu0 0.0
  %579 = vmatprep.subr.mxu0 0.0
  %580 = vmatpush1.msra.mxu0 0.0
  %581 = vmatprep.subr.mxu0 0.0
  %582 = vmatpush1.msra.mxu0 0.0
  %583 = vmatprep.subr.mxu0 0.0
  %584 = vmatpush1.msra.mxu0 0.0
  %585 = vmatprep.subr.mxu0 0.0
  %586 = vmatpush1.msra.mxu0 0.0
  %587 = vmatprep.subr.mxu0 0.0
  %588 = vmatpush1.msra.mxu0 0.0
  %589 = vmatprep.subr.mxu0 0.0
  %590 = vmatpush1.msra.mxu0 0.0
  %591 = vmatprep.mubr.f32.mxu0 0.0
  %592 = vmatmul.mubr.f32.gmra.mrb[0].mxu0 %v525
  %v593 = vpop.f32.mrb[0].mxu0
  %v594 = vadd.f32 %v523, %v593
  %v595 = vpop.f32.mrb[0].mxu0
  %596 = vdwg.mxu0
  %v597 = vtanh.pop %v594
  %598 = vset.pattern.permute.xlu0 7
  %599 = vperm.xlu0 %598, %v31
  %v600 = vpop.permute.xlu0 %599
  %v602 = vmul.f32 %v600, %v40
  %v603 = vadd.f32 %v602, %v30
  %v605 = vsel %vm43, %v597, 0
  %607 = vmatprep.subr.mxu0 0.0
  %608 = vmatpush1.msra.mxu0 %v18
  %609 = vmatprep.subr.mxu0 0.0
  %610 = vmatpush1.msra.mxu0 %v19
  %611 = vmatprep.subr.mxu0 0.0
  %612 = vmatpush1.msra.mxu0 %v20
  %613 = vmatprep.subr.mxu0 0.0
  %614 = vmatpush1.msra.mxu0 %v21
  %615 = vmatprep.subr.mxu0 0.0
  %616 = vmatpush1.msra.mxu0 %v22
  %617 = vmatprep.subr.mxu0 0.0
  %618 = vmatpush1.msra.mxu0 %v23
  %619 = vmatprep.subr.mxu0 0.0
  %620 = vmatpush1.msra.mxu0 %v24
  %621 = vmatprep.subr.mxu0 0.0
  %622 = vmatpush1.msra.mxu0 %v25
  %623 = vmatprep.subr.mxu0 0.0
  %624 = vmatpush1.msra.mxu0 0.0
  %625 = vmatprep.subr.mxu0 0.0
  %626 = vmatpush1.msra.mxu0 0.0
  %627 = vmatprep.subr.mxu0 0.0
  %628 = vmatpush1.msra.mxu0 0.0
  %629 = vmatprep.subr.mxu0 0.0
  %630 = vmatpush1.msra.mxu0 0.0
  %631 = vmatprep.subr.mxu0 0.0
  %632 = vmatpush1.msra.mxu0 0.0
  %633 = vmatprep.subr.mxu0 0.0
  %634 = vmatpush1.msra.mxu0 0.0
  %635 = vmatprep.subr.mxu0 0.0
  %636 = vmatpush1.msra.mxu0 0.0
  %637 = vmatprep.subr.mxu0 0.0
  %638 = vmatpush1.msra.mxu0 0.0
  %639 = vmatprep.subr.mxu0 0.0
  %640 = vmatpush1.msra.mxu0 0.0
  %641 = vmatprep.subr.mxu0 0.0
  %642 = vmatpush1.msra.mxu0 0.0
  %643 = vmatprep.subr.mxu0 0.0
  %644 = vmatpush1.msra.mxu0 0.0
  %645 = vmatprep.subr.mxu0 0.0
  %646 = vmatpush1.msra.mxu0 0.0
  %647 = vmatprep.subr.mxu0 0.0
  %648 = vmatpush1.msra.mxu0 0.0
  %649 = vmatprep.subr.mxu0 0.0
  %650 = vmatpush1.msra.mxu0 0.0
  %651 = vmatprep.subr.mxu0 0.0
  %652 = vmatpush1.msra.mxu0 0.0
  %653 = vmatprep.subr.mxu0 0.0
  %654 = vmatpush1.msra.mxu0 0.0
  %655 = vmatprep.subr.mxu0 0.0
  %656 = vmatpush1.msra.mxu0 0.0
  %657 = vmatprep.subr.mxu0 0.0
  %658 = vmatpush1.msra.mxu0 0.0
  %659 = vmatprep.subr.mxu0 0.0
  %660 = vmatpush1.msra.mxu0 0.0
  %661 = vmatprep.subr.mxu0 0.0
  %662 = vmatpush1.msra.mxu0 0.0
  %663 = vmatprep.subr.mxu0 0.0
  %664 = vmatpush1.msra.mxu0 0.0
  %665 = vmatprep.subr.mxu0 0.0
  %666 = vmatpush1.msra.mxu0 0.0
  %667 = vmatprep.subr.mxu0 0.0
  %668 = vmatpush1.msra.mxu0 0.0
  %669 = vmatprep.subr.mxu0 0.0
  %670 = vmatpush1.msra.mxu0 0.0
  %671 = vmatprep.mubr.f32.mxu0 0.0
  %672 = vmatmul.mubr.f32.gmra.mrb[0].mxu0 %v605
  %v673 = vpop.f32.mrb[0].mxu0
  %v674 = vadd.f32 %v603, %v673
  %v675 = vpop.f32.mrb[0].mxu0
  %676 = vdwg.mxu0
  %v677 = vtanh.pop %v674
  %v678 = vlaneseq
  %v679 = vshrl.u32 %v678, 7
  %v680 = vsub.s32 2, %v679
  %v681 = vrot.slane %v26, %v680
  %v682 = vmul.f32 %v677, %v681
  %v683 = vsel %vm43, %v682, 0.0
  %684 = vadd.xlane.f32.xlu0 %v683
  %v685 = vpop.xlane.xlu0 %684
  %s686 = sld [smem:[#allocation2]]
  %v687 = vstv %s686
  %v688 = vadd.f32 %v685, %v687
  %vm689 = vcmask 7168
  %690 = vst.msk [vmem:[%s4] sm:$0xff] %vm689, %v688
  // Predicated region
  $region18: #{rnn_model_forward.1} parent=0 // pred_check
    _
  $region19: #{rnn_model_forward.1} parent=0 // pred_check_branch
    %692 = sbr.rel (0) target = $region21
  $region20: #{rnn_model_forward.1} parent=0 // pred_region
    _
  $region21: #{rnn_model_forward.1} parent=0 // pred_fallthru
    _
  // Predicated region
  $region22: #{rnn_model_forward.1} parent=0 // pred_check
    _
  $region23: #{rnn_model_forward.1} parent=0 // pred_check_branch
    %694 = sbr.rel (0) target = $region25
  $region24: #{rnn_model_forward.1} parent=0 // pred_region
    _
  $region25: #{rnn_model_forward.1} parent=0 // pred_fallthru
    _

</llo_original>
